<compile_context>
chip_gen: v6e
topology: v6e:2x2x1
jax: 0.10.0
libtpu: 0.0.40
codegen_flags: <defaults>
</compile_context>

<pallas_src>
import functools

import jax
import jax.numpy as jnp
from jax import lax
from jax.experimental import pallas as pl
from jax.experimental.pallas import tpu as pltpu


def _round_up(x, m):
    return ((x + m - 1) // m) * m


def item_tower_kernel(item_ref, brand_ref, desc_ref, price_ref,   # (tb,1)/(tb,L) VMEM
                      tab_ref, w_ref, b_ref,                      # VMEM resident
                      out_ref,                                    # (tb, n_pad)
                      *, item_dim, brand_dim, vocab_size, seq_len):
    tb = out_ref.shape[0]
    k_sel = tab_ref.shape[0]

    brand_off = item_dim
    desc_off = item_dim + brand_dim
    price_col = item_dim + brand_dim + vocab_size

    col = lax.broadcasted_iota(jnp.int32, (tb, k_sel), 1)

    # --- selector slab: one-hot(item) + one-hot(brand), exact row selection ---
    sel = (col == item_ref[...]).astype(jnp.float32)
    sel = sel + (col == (brand_ref[...] + brand_off)).astype(jnp.float32)

    # --- description token counts (1/L mean factor folded into tab_ref rows) ---
    desc = desc_ref[...] + desc_off                        # (tb, L) int32
    for l in range(seq_len):                               # static, tiny L
        sel = sel + (col == desc[:, l:l + 1]).astype(jnp.float32)

    # --- price goes to its own selector column (tab has a 1.0 there) ---
    sel = sel + jnp.where(col == price_col, price_ref[...], 0.0)

    # --- "gather + concat": x = [item_emb | brand_emb | desc_mean | price] ---
    x = jnp.dot(sel, tab_ref[...], preferred_element_type=jnp.float32)

    # --- fc: single lane-dense MXU matmul + bias ---
    out_ref[...] = (jnp.dot(x, w_ref[...], preferred_element_type=jnp.float32)
                    + b_ref[...]).astype(out_ref.dtype)


def prepare_item_tower_params(params, seq_len):
    """One-time parameter prep (padding, casts, 1/L folding) — hoisted out of forward."""
    item_tab, brand_tab, desc_tab, w, b = params
    item_dim, E = item_tab.shape
    brand_dim = brand_tab.shape[0]
    vocab_size, D = desc_tab.shape
    in_dim = 2 * E + D + 1
    out_dim = w.shape[1]

    k_sel = _round_up(item_dim + brand_dim + vocab_size + 1, 128)
    k_feat = _round_up(in_dim, 128)
    n_pad = _round_up(out_dim, 128)

    # Block-diagonal gather table: selector @ tab == concatenated features.
    tab = jnp.zeros((k_sel, k_feat), jnp.float32)
    tab = tab.at[0:item_dim, 0:E].set(item_tab.astype(jnp.float32))
    tab = tab.at[item_dim:item_dim + brand_dim, E:2 * E].set(
        brand_tab.astype(jnp.float32))
    tab = tab.at[item_dim + brand_dim:item_dim + brand_dim + vocab_size,
                 2 * E:2 * E + D].set(desc_tab.astype(jnp.float32) / seq_len)
    tab = tab.at[item_dim + brand_dim + vocab_size, 2 * E + D].set(1.0)

    w_pad = jnp.zeros((k_feat, n_pad), jnp.float32).at[:in_dim, :out_dim].set(
        w.astype(jnp.float32))
    b_pad = jnp.zeros((1, n_pad), jnp.float32).at[:, :out_dim].set(
        b.astype(jnp.float32).reshape(1, out_dim))

    meta = dict(item_dim=item_dim, brand_dim=brand_dim, vocab_size=vocab_size,
                seq_len=seq_len, out_dim=out_dim)
    return (tab, w_pad, b_pad), meta


def item_tower_forward(item, brand, price, description, prepared, meta, *, tb=None):
    tab, w_pad, b_pad = prepared
    B = item.shape[0]
    L = description.shape[1]
    assert L == meta["seq_len"]
    out_dim = meta["out_dim"]
    k_sel, k_feat = tab.shape
    n_pad = w_pad.shape[1]

    # Batch tile: multiple of 8 sublanes, up to 256 (amortizes per-step overhead,
    # leaves >= 2 tiles for megacore parallelism on larger batches).
    if tb is None:
        tb = min(256, _round_up(B, 8))
    num_tiles = pl.cdiv(B, tb)
    b_rows = num_tiles * tb
    pad = b_rows - B

    item_i = jnp.pad(item.astype(jnp.int32), (0, pad)).reshape(b_rows, 1)
    brand_i = jnp.pad(brand.astype(jnp.int32), (0, pad)).reshape(b_rows, 1)
    desc_i = jnp.pad(description.astype(jnp.int32), ((0, pad), (0, 0)))
    price_p = jnp.pad(price.astype(jnp.float32), (0, pad)).reshape(b_rows, 1)

    kernel = functools.partial(
        item_tower_kernel,
        item_dim=meta["item_dim"], brand_dim=meta["brand_dim"],
        vocab_size=meta["vocab_size"], seq_len=meta["seq_len"])

    out = pl.pallas_call(
        kernel,
        out_shape=jax.ShapeDtypeStruct((b_rows, n_pad), jnp.float32),
        grid=(num_tiles,),
        in_specs=[
            pl.BlockSpec((tb, 1), lambda i: (i, 0)),            # item indices
            pl.BlockSpec((tb, 1), lambda i: (i, 0)),            # brand indices
            pl.BlockSpec((tb, L), lambda i: (i, 0)),            # description tokens
            pl.BlockSpec((tb, 1), lambda i: (i, 0)),            # price
            pl.BlockSpec((k_sel, k_feat), lambda i: (0, 0)),    # gather table (resident)
            pl.BlockSpec((k_feat, n_pad), lambda i: (0, 0)),    # fc W (resident)
            pl.BlockSpec((1, n_pad), lambda i: (0, 0)),         # fc b (resident)
        ],
        out_specs=pl.BlockSpec((tb, n_pad), lambda i: (i, 0)),
        compiler_params=pltpu.CompilerParams(
            dimension_semantics=("parallel",)),                 # batch tiles -> both TCs
    )(item_i, brand_i, desc_i, price_p, tab, w_pad, b_pad)

    return out[:B, :out_dim]


def init_params(key, item_dim, brand_dim, vocab_size, embedding_dim,
                description_embedding_size, out_dim=64):
    k1, k2, k3, k4, k5 = jax.random.split(key, 5)
    # nn.Embedding default init: N(0, 1)
    item_tab = jax.random.normal(k1, (item_dim, embedding_dim), jnp.float32)
    brand_tab = jax.random.normal(k2, (brand_dim, embedding_dim), jnp.float32)
    desc_tab = jax.random.normal(k3, (vocab_size, description_embedding_size),
                                 jnp.float32)
    # nn.Linear default init: U(-1/sqrt(fan_in), 1/sqrt(fan_in))
    in_dim = embedding_dim * 2 + 1 + description_embedding_size
    bound = 1.0 / jnp.sqrt(in_dim)
    w = jax.random.uniform(k4, (in_dim, out_dim), jnp.float32, -bound, bound)
    b = jax.random.uniform(k5, (out_dim,), jnp.float32, -bound, bound)
    return item_tab, brand_tab, desc_tab, w, b


def reference_forward(item, brand, price, description, params):
    item_tab, brand_tab, desc_tab, w, b = params
    item_emb = jnp.take(item_tab, item, axis=0)
    brand_emb = jnp.take(brand_tab, brand, axis=0)
    desc_vec = jnp.take(desc_tab, description, axis=0).mean(axis=1)
    x = jnp.concatenate([item_emb, brand_emb, desc_vec, price[:, None]], axis=1)
    return x @ w + b


if __name__ == "__main__":
    B, L = 8, 8
    item_dim, brand_dim = 32, 16
    vocab_size = 64
    embedding_dim = 16
    description_embedding_size = 32

    key = jax.random.PRNGKey(0)
    kp, ki, kb, kd, kpr = jax.random.split(key, 5)

    params = init_params(kp, item_dim, brand_dim, vocab_size,
                         embedding_dim, description_embedding_size)
    prepared, meta = prepare_item_tower_params(params, seq_len=L)

    item = jax.random.randint(ki, (B,), 0, item_dim, jnp.int32)
    brand = jax.random.randint(kb, (B,), 0, brand_dim, jnp.int32)
    description = jax.random.randint(kd, (B, L), 0, vocab_size, jnp.int32)
    price = jax.random.normal(kpr, (B,), jnp.float32)

    out = item_tower_forward(item, brand, price, description, prepared, meta)
    out = jax.block_until_ready(out)

    ref = reference_forward(item, brand, price, description, params)
    assert out.shape == (B, 64)
    assert jnp.allclose(out, ref, atol=1e-3, rtol=1e-3), "mismatch vs reference"

    print("KERNEL_OK")
</pallas_src>

<mosaic_0001>
module attributes {stable_mosaic.version = 11 : i64} {
  func.func @item_tower_kernel(%arg0: i32, %arg1: memref<8x1xi32, #tpu.memory_space<vmem>>, %arg2: memref<8x1xi32, #tpu.memory_space<vmem>>, %arg3: memref<8x8xi32, #tpu.memory_space<vmem>>, %arg4: memref<8x1xf32, #tpu.memory_space<vmem>>, %arg5: memref<128x128xf32, #tpu.memory_space<vmem>>, %arg6: memref<128x128xf32, #tpu.memory_space<vmem>>, %arg7: memref<1x128xf32, #tpu.memory_space<vmem>>, %arg8: memref<8x128xf32, #tpu.memory_space<vmem>>) attributes {dimension_semantics = [#tpu.dimension_semantics<parallel>], iteration_bounds = array<i64: 1>, scalar_prefetch = 0 : i64, scratch_operands = 0 : i64, tpu.core_type = #tpu.core_type<tc>, window_params = [{transform_indices = @transform_0, window_bounds = array<i64: 8, 1>}, {transform_indices = @transform_1, window_bounds = array<i64: 8, 1>}, {transform_indices = @transform_2, window_bounds = array<i64: 8, 8>}, {transform_indices = @transform_3, window_bounds = array<i64: 8, 1>}, {pipeline_mode = #tpu.pipeline_mode<synchronous>, transform_indices = @transform_4, window_bounds = array<i64: 128, 128>}, {pipeline_mode = #tpu.pipeline_mode<synchronous>, transform_indices = @transform_5, window_bounds = array<i64: 128, 128>}, {pipeline_mode = #tpu.pipeline_mode<synchronous>, transform_indices = @transform_6, window_bounds = array<i64: 1, 128>}, {transform_indices = @transform_7, window_bounds = array<i64: 8, 128>}]} {
    %0 = tpu.iota {dimensions = array<i32: 1>} : vector<8x128xi32>
    %c0 = arith.constant 0 : index
    %c0_0 = arith.constant 0 : index
    %1 = vector.load %arg1[%c0, %c0_0] : memref<8x1xi32, #tpu.memory_space<vmem>>, vector<8x1xi32>
    %2 = vector.broadcast %1 : vector<8x1xi32> to vector<8x128xi32>
    %3 = arith.cmpi eq, %0, %2 : vector<8x128xi32>
    %4 = arith.extui %3 : vector<8x128xi1> to vector<8x128xi32>
    %5 = arith.sitofp %4 : vector<8x128xi32> to vector<8x128xf32>
    %c0_1 = arith.constant 0 : index
    %c0_2 = arith.constant 0 : index
    %6 = vector.load %arg2[%c0_1, %c0_2] : memref<8x1xi32, #tpu.memory_space<vmem>>, vector<8x1xi32>
    %c32_i32 = arith.constant 32 : i32
    %7 = vector.broadcast %c32_i32 : i32 to vector<8x1xi32>
    %8 = arith.addi %6, %7 : vector<8x1xi32>
    %9 = vector.broadcast %8 : vector<8x1xi32> to vector<8x128xi32>
    %10 = arith.cmpi eq, %0, %9 : vector<8x128xi32>
    %11 = arith.extui %10 : vector<8x128xi1> to vector<8x128xi32>
    %12 = arith.sitofp %11 : vector<8x128xi32> to vector<8x128xf32>
    %13 = arith.addf %5, %12 : vector<8x128xf32>
    %c0_3 = arith.constant 0 : index
    %c0_4 = arith.constant 0 : index
    %14 = vector.load %arg3[%c0_3, %c0_4] : memref<8x8xi32, #tpu.memory_space<vmem>>, vector<8x8xi32>
    %c48_i32 = arith.constant 48 : i32
    %15 = vector.broadcast %c48_i32 : i32 to vector<8x8xi32>
    %16 = arith.addi %14, %15 : vector<8x8xi32>
    %17 = vector.extract_strided_slice %16 {offsets = [0, 0], sizes = [8, 1], strides = [1, 1]} : vector<8x8xi32> to vector<8x1xi32>
    %18 = vector.broadcast %17 : vector<8x1xi32> to vector<8x128xi32>
    %19 = arith.cmpi eq, %0, %18 : vector<8x128xi32>
    %20 = arith.extui %19 : vector<8x128xi1> to vector<8x128xi32>
    %21 = arith.sitofp %20 : vector<8x128xi32> to vector<8x128xf32>
    %22 = arith.addf %13, %21 : vector<8x128xf32>
    %23 = vector.extract_strided_slice %16 {offsets = [0, 1], sizes = [8, 1], strides = [1, 1]} : vector<8x8xi32> to vector<8x1xi32>
    %24 = vector.broadcast %23 : vector<8x1xi32> to vector<8x128xi32>
    %25 = arith.cmpi eq, %0, %24 : vector<8x128xi32>
    %26 = arith.extui %25 : vector<8x128xi1> to vector<8x128xi32>
    %27 = arith.sitofp %26 : vector<8x128xi32> to vector<8x128xf32>
    %28 = arith.addf %22, %27 : vector<8x128xf32>
    %29 = vector.extract_strided_slice %16 {offsets = [0, 2], sizes = [8, 1], strides = [1, 1]} : vector<8x8xi32> to vector<8x1xi32>
    %30 = vector.broadcast %29 : vector<8x1xi32> to vector<8x128xi32>
    %31 = arith.cmpi eq, %0, %30 : vector<8x128xi32>
    %32 = arith.extui %31 : vector<8x128xi1> to vector<8x128xi32>
    %33 = arith.sitofp %32 : vector<8x128xi32> to vector<8x128xf32>
    %34 = arith.addf %28, %33 : vector<8x128xf32>
    %35 = vector.extract_strided_slice %16 {offsets = [0, 3], sizes = [8, 1], strides = [1, 1]} : vector<8x8xi32> to vector<8x1xi32>
    %36 = vector.broadcast %35 : vector<8x1xi32> to vector<8x128xi32>
    %37 = arith.cmpi eq, %0, %36 : vector<8x128xi32>
    %38 = arith.extui %37 : vector<8x128xi1> to vector<8x128xi32>
    %39 = arith.sitofp %38 : vector<8x128xi32> to vector<8x128xf32>
    %40 = arith.addf %34, %39 : vector<8x128xf32>
    %41 = vector.extract_strided_slice %16 {offsets = [0, 4], sizes = [8, 1], strides = [1, 1]} : vector<8x8xi32> to vector<8x1xi32>
    %42 = vector.broadcast %41 : vector<8x1xi32> to vector<8x128xi32>
    %43 = arith.cmpi eq, %0, %42 : vector<8x128xi32>
    %44 = arith.extui %43 : vector<8x128xi1> to vector<8x128xi32>
    %45 = arith.sitofp %44 : vector<8x128xi32> to vector<8x128xf32>
    %46 = arith.addf %40, %45 : vector<8x128xf32>
    %47 = vector.extract_strided_slice %16 {offsets = [0, 5], sizes = [8, 1], strides = [1, 1]} : vector<8x8xi32> to vector<8x1xi32>
    %48 = vector.broadcast %47 : vector<8x1xi32> to vector<8x128xi32>
    %49 = arith.cmpi eq, %0, %48 : vector<8x128xi32>
    %50 = arith.extui %49 : vector<8x128xi1> to vector<8x128xi32>
    %51 = arith.sitofp %50 : vector<8x128xi32> to vector<8x128xf32>
    %52 = arith.addf %46, %51 : vector<8x128xf32>
    %53 = vector.extract_strided_slice %16 {offsets = [0, 6], sizes = [8, 1], strides = [1, 1]} : vector<8x8xi32> to vector<8x1xi32>
    %54 = vector.broadcast %53 : vector<8x1xi32> to vector<8x128xi32>
    %55 = arith.cmpi eq, %0, %54 : vector<8x128xi32>
    %56 = arith.extui %55 : vector<8x128xi1> to vector<8x128xi32>
    %57 = arith.sitofp %56 : vector<8x128xi32> to vector<8x128xf32>
    %58 = arith.addf %52, %57 : vector<8x128xf32>
    %59 = vector.extract_strided_slice %16 {offsets = [0, 7], sizes = [8, 1], strides = [1, 1]} : vector<8x8xi32> to vector<8x1xi32>
    %60 = vector.broadcast %59 : vector<8x1xi32> to vector<8x128xi32>
    %61 = arith.cmpi eq, %0, %60 : vector<8x128xi32>
    %62 = arith.extui %61 : vector<8x128xi1> to vector<8x128xi32>
    %63 = arith.sitofp %62 : vector<8x128xi32> to vector<8x128xf32>
    %64 = arith.addf %58, %63 : vector<8x128xf32>
    %c112_i32 = arith.constant 112 : i32
    %65 = vector.broadcast %c112_i32 : i32 to vector<8x128xi32>
    %66 = arith.cmpi eq, %0, %65 : vector<8x128xi32>
    %c0_5 = arith.constant 0 : index
    %c0_6 = arith.constant 0 : index
    %67 = vector.load %arg4[%c0_5, %c0_6] : memref<8x1xf32, #tpu.memory_space<vmem>>, vector<8x1xf32>
    %cst = arith.constant 0.000000e+00 : f32
    %68 = vector.shape_cast %67 : vector<8x1xf32> to vector<8x1xf32>
    %69 = vector.broadcast %68 : vector<8x1xf32> to vector<8x128xf32>
    %70 = vector.broadcast %cst : f32 to vector<8x128xf32>
    %71 = arith.select %66, %69, %70 : vector<8x128xi1>, vector<8x128xf32>
    %72 = arith.addf %64, %71 : vector<8x128xf32>
    %c0_7 = arith.constant 0 : index
    %c0_8 = arith.constant 0 : index
    %73 = vector.load %arg5[%c0_7, %c0_8] : memref<128x128xf32, #tpu.memory_space<vmem>>, vector<128x128xf32>
    %cst_9 = arith.constant dense<0.000000e+00> : vector<8x128xf32>
    %74 = tpu.matmul %72, %73, %cst_9 {dimension_numbers = #tpu.dot_dimension_numbers<[1], [0], [0], [1], [0, 0, 1, 1], [], []>} : vector<8x128xf32>, vector<128x128xf32>, vector<8x128xf32> -> vector<8x128xf32>
    %c0_10 = arith.constant 0 : index
    %c0_11 = arith.constant 0 : index
    %75 = vector.load %arg6[%c0_10, %c0_11] : memref<128x128xf32, #tpu.memory_space<vmem>>, vector<128x128xf32>
    %cst_12 = arith.constant dense<0.000000e+00> : vector<8x128xf32>
    %76 = tpu.matmul %74, %75, %cst_12 {dimension_numbers = #tpu.dot_dimension_numbers<[1], [0], [0], [1], [0, 0, 1, 1], [], []>} : vector<8x128xf32>, vector<128x128xf32>, vector<8x128xf32> -> vector<8x128xf32>
    %c0_13 = arith.constant 0 : index
    %c0_14 = arith.constant 0 : index
    %77 = vector.load %arg7[%c0_13, %c0_14] : memref<1x128xf32, #tpu.memory_space<vmem>>, vector<1x128xf32>
    %78 = vector.broadcast %77 : vector<1x128xf32> to vector<8x128xf32>
    %79 = arith.addf %76, %78 : vector<8x128xf32>
    %c0_15 = arith.constant 0 : index
    %c0_16 = arith.constant 0 : index
    %80 = vector.load %arg8[%c0_15, %c0_16] : memref<8x128xf32, #tpu.memory_space<vmem>>, vector<8x128xf32>
    tpu.vector_store %arg8[%c0_15, %c0_16], %79 {strides = array<i32>} : memref<8x128xf32, #tpu.memory_space<vmem>>, vector<8x128xf32>,
    return
  }
  func.func @transform_0(%arg0: i32) -> (i32, i32) {
    %c0_i32 = arith.constant 0 : i32
    %c0_i32_0 = arith.constant 0 : i32
    return %arg0, %c0_i32 : i32, i32
  }
  func.func @transform_1(%arg0: i32) -> (i32, i32) {
    %c0_i32 = arith.constant 0 : i32
    %c0_i32_0 = arith.constant 0 : i32
    return %arg0, %c0_i32 : i32, i32
  }
  func.func @transform_2(%arg0: i32) -> (i32, i32) {
    %c0_i32 = arith.constant 0 : i32
    %c0_i32_0 = arith.constant 0 : i32
    return %arg0, %c0_i32 : i32, i32
  }
  func.func @transform_3(%arg0: i32) -> (i32, i32) {
    %c0_i32 = arith.constant 0 : i32
    %c0_i32_0 = arith.constant 0 : i32
    return %arg0, %c0_i32 : i32, i32
  }
  func.func @transform_4(%arg0: i32) -> (i32, i32) {
    %c0_i32 = arith.constant 0 : i32
    %c0_i32_0 = arith.constant 0 : i32
    %c0_i32_1 = arith.constant 0 : i32
    return %c0_i32, %c0_i32_0 : i32, i32
  }
  func.func @transform_5(%arg0: i32) -> (i32, i32) {
    %c0_i32 = arith.constant 0 : i32
    %c0_i32_0 = arith.constant 0 : i32
    %c0_i32_1 = arith.constant 0 : i32
    return %c0_i32, %c0_i32_0 : i32, i32
  }
  func.func @transform_6(%arg0: i32) -> (i32, i32) {
    %c0_i32 = arith.constant 0 : i32
    %c0_i32_0 = arith.constant 0 : i32
    %c0_i32_1 = arith.constant 0 : i32
    return %c0_i32, %c0_i32_0 : i32, i32
  }
  func.func @transform_7(%arg0: i32) -> (i32, i32) {
    %c0_i32 = arith.constant 0 : i32
    %c0_i32_0 = arith.constant 0 : i32
    return %arg0, %c0_i32 : i32, i32
  }
}

</mosaic_0001>

<llo_original>
// kernel: tpu_custom_call.1
$region0: #{tpu_custom_call.1}
  #allocation0 [shape = 'u32[]', space=smem, size = 0x4, offset = 0x4, fixed_abs, tag = 'smem constant byte address 0x4 - core index']
  #allocation1 [shape = 'u32[144,128]{1,0:T(1,128)}', space=vmem, size = 0x12000, scoped, tag = 'internal scratch']
  %s0 = inlined_call_operand.vmem [shape: s32[8,1], index: 0, kind: input, shape index: {}]
  %s1 = inlined_call_operand.vmem [shape: s32[8,1], index: 1, kind: input, shape index: {}]
  %s2 = inlined_call_operand.vmem [shape: s32[8,8], index: 2, kind: input, shape index: {}]
  %s3 = inlined_call_operand.vmem [shape: f32[8,1], index: 3, kind: input, shape index: {}]
  %s4 = inlined_call_operand.hbm [shape: f32[128,128], index: 4, kind: input, shape index: {}]
  %s5 = inlined_call_operand.hbm [shape: f32[128,128], index: 5, kind: input, shape index: {}]
  %s6 = inlined_call_operand.vmem [shape: f32[1,128], index: 6, kind: input, shape index: {}]
  %s7 = inlined_call_operand.hbm [shape: f32[8,128], index: 7, kind: output, shape index: {}]
  %s8 = sld [smem:[#allocation0]]
  $region46: #{tpu_custom_call.1} parent=0
    _
  %s10 = ssub.s32 1, %s8
  %s11 = scalar_select 0, %s10, %s8
  $region1: #{tpu_custom_call.1} parent=0
    #allocation2 [shape = 'u8[65536]{0}', space=vmem, size = 0x10000, scoped, tag = 'input window, operand 4, single buffered']
    #allocation3 [shape = 's32[1]{0}', space=sflag, size = 0x4, scoped, tag = 'scoped memory for tpu_custom_call.1']
    #allocation4 [shape = 's32[1]{0}', space=sflag, size = 0x4, scoped, tag = 'scoped memory for tpu_custom_call.1']
    #allocation5 [shape = 'u8[65536]{0}', space=vmem, size = 0x10000, scoped, tag = 'input window, operand 5, single buffered']
    #allocation6 [shape = 's32[1]{0}', space=sflag, size = 0x4, scoped, tag = 'scoped memory for tpu_custom_call.1']
    #allocation7 [shape = 'u8[4096]{0}', space=vmem, size = 0x1000, scoped, tag = 'output window, operand 0, single buffered']
    %12 = vsyncpa [#allocation3], 0
    %13 = vsyncpa [#allocation6], 0
    %14 = vsyncpa [#allocation4], 0
    // Predicated region
    $region2: #{tpu_custom_call.1} parent=1 // pred_check
      _
    $region3: #{tpu_custom_call.1} parent=1 // pred_check_branch
      %16 = sbr.rel (0) target = $region5
    $region4: #{tpu_custom_call.1} parent=1 // pred_region
      _
    $region5: #{tpu_custom_call.1} parent=1 // pred_fallthru
      _
    // Predicated region
    $region6: #{tpu_custom_call.1} parent=1 // pred_check
      _
    $region7: #{tpu_custom_call.1} parent=1 // pred_check_branch
      %18 = sbr.rel (0) target = $region9
    $region8: #{tpu_custom_call.1} parent=1 // pred_region
      _
    $region9: #{tpu_custom_call.1} parent=1 // pred_fallthru
      _
    // Predicated region
    $region10: #{tpu_custom_call.1} parent=1 // pred_check
      _
    $region11: #{tpu_custom_call.1} parent=1 // pred_check_branch
      %20 = sbr.rel (0) target = $region13
    $region12: #{tpu_custom_call.1} parent=1 // pred_region
      _
    $region13: #{tpu_custom_call.1} parent=1 // pred_fallthru
      _
    // Predicated region
    $region14: #{tpu_custom_call.1} parent=1 // pred_check
      _
    $region15: #{tpu_custom_call.1} parent=1 // pred_check_branch
      %22 = sbr.rel (0) target = $region17
    $region16: #{tpu_custom_call.1} parent=1 // pred_region
      _
    $region17: #{tpu_custom_call.1} parent=1 // pred_fallthru
      _
    // Predicated region
    $region18: #{tpu_custom_call.1} parent=1 // pred_check
      _
    $region19: #{tpu_custom_call.1} parent=1 // pred_check_branch
      %24 = sbr.rel (0) target = $region21
    $region20: #{tpu_custom_call.1} parent=1 // pred_region
      %s26 = ssub.s32 2048, 2048
      %27 = vsyncadd [#allocation3], %s26
      %s28 = sshll.u32 [#allocation2], 4
      %s29 = int_to_ptr.vmem [resolvable:$true] %s28
      %34 = dma.hbm_to_vmem [thread:$0]  %s4, 2048, %s29, [#allocation3], 128, 128, 8
    $region21: #{tpu_custom_call.1} parent=1 // pred_fallthru
      _
    // Predicated region
    $region22: #{tpu_custom_call.1} parent=1 // pred_check
      _
    $region23: #{tpu_custom_call.1} parent=1 // pred_check_branch
      %36 = sbr.rel (0) target = $region25
    $region24: #{tpu_custom_call.1} parent=1 // pred_region
      %s38 = ssub.s32 2048, 2048
      %39 = vsyncadd [#allocation6], %s38
      %s40 = sshll.u32 [#allocation5], 4
      %s41 = int_to_ptr.vmem [resolvable:$true] %s40
      %46 = dma.hbm_to_vmem [thread:$0]  %s5, 2048, %s41, [#allocation6], 128, 128, 8
    $region25: #{tpu_custom_call.1} parent=1 // pred_fallthru
      _
    // Predicated region
    $region26: #{tpu_custom_call.1} parent=1 // pred_check
      _
    $region27: #{tpu_custom_call.1} parent=1 // pred_check_branch
      %48 = sbr.rel (0) target = $region29
    $region28: #{tpu_custom_call.1} parent=1 // pred_region
      _
    $region29: #{tpu_custom_call.1} parent=1 // pred_fallthru
      _
    // Predicated region
    $region30: #{tpu_custom_call.1} parent=1 // pred_check
      _
    $region31: #{tpu_custom_call.1} parent=1 // pred_check_branch
      %50 = sbr.rel (0) target = $region33
    $region32: #{tpu_custom_call.1} parent=1 // pred_region
      %51 = dma.done [#allocation3], 2048
    $region33: #{tpu_custom_call.1} parent=1 // pred_fallthru
      _
    // Predicated region
    $region34: #{tpu_custom_call.1} parent=1 // pred_check
      _
    $region35: #{tpu_custom_call.1} parent=1 // pred_check_branch
      %53 = sbr.rel (0) target = $region37
    $region36: #{tpu_custom_call.1} parent=1 // pred_region
      %54 = dma.done [#allocation6], 2048
    $region37: #{tpu_custom_call.1} parent=1 // pred_fallthru
      _
    %v55 = vlaneseq
    %v56 = vand.u32 %v55, 127
    %v57 = vld [vmem:[%s0] sm:$0xff]
    %58 = vset.pattern.permute.xlu0 0
    %59 = vperm.xlu0 %58, %v57
    %v60 = vpop.permute.xlu0 %59
    %vm61 = vcmp.eq.s32.totalorder %v56, %v60
    %v62 = vsel %vm61, 1, 0
    %v63 = vcvt.s32.f32 %v62
    %v64 = vld [vmem:[%s1] sm:$0xff]
    %v65 = vadd.s32 %v64, 32
    %66 = vset.pattern.permute.xlu0 0
    %67 = vperm.xlu0 %66, %v65
    %v68 = vpop.permute.xlu0 %67
    %vm69 = vcmp.eq.s32.totalorder %v56, %v68
    %v70 = vsel %vm69, 1, 0
    %v71 = vcvt.s32.f32 %v70
    %v72 = vadd.f32 %v63, %v71
    %v73 = vld [vmem:[%s2] sm:$0xff]
    %v74 = vadd.s32 %v73, 48
    %75 = vset.pattern.permute.xlu0 0
    %76 = vperm.xlu0 %75, %v74
    %v77 = vpop.permute.xlu0 %76
    %vm78 = vcmp.eq.s32.totalorder %v56, %v77
    %v79 = vsel %vm78, 1, 0
    %v80 = vcvt.s32.f32 %v79
    %v81 = vadd.f32 %v72, %v80
    %82 = vset.pattern.permute.xlu0 1
    %83 = vperm.xlu0 %82, %v74
    %v84 = vpop.permute.xlu0 %83
    %vm85 = vcmp.eq.s32.totalorder %v56, %v84
    %v86 = vsel %vm85, 1, 0
    %v87 = vcvt.s32.f32 %v86
    %v88 = vadd.f32 %v81, %v87
    %89 = vset.pattern.permute.xlu0 2
    %90 = vperm.xlu0 %89, %v74
    %v91 = vpop.permute.xlu0 %90
    %vm92 = vcmp.eq.s32.totalorder %v56, %v91
    %v93 = vsel %vm92, 1, 0
    %v94 = vcvt.s32.f32 %v93
    %v95 = vadd.f32 %v88, %v94
    %96 = vset.pattern.permute.xlu0 3
    %97 = vperm.xlu0 %96, %v74
    %v98 = vpop.permute.xlu0 %97
    %vm99 = vcmp.eq.s32.totalorder %v56, %v98
    %v100 = vsel %vm99, 1, 0
    %v101 = vcvt.s32.f32 %v100
    %v102 = vadd.f32 %v95, %v101
    %103 = vset.pattern.permute.xlu0 4
    %104 = vperm.xlu0 %103, %v74
    %v105 = vpop.permute.xlu0 %104
    %vm106 = vcmp.eq.s32.totalorder %v56, %v105
    %v107 = vsel %vm106, 1, 0
    %v108 = vcvt.s32.f32 %v107
    %v109 = vadd.f32 %v102, %v108
    %110 = vset.pattern.permute.xlu0 5
    %111 = vperm.xlu0 %110, %v74
    %v112 = vpop.permute.xlu0 %111
    %vm113 = vcmp.eq.s32.totalorder %v56, %v112
    %v114 = vsel %vm113, 1, 0
    %v115 = vcvt.s32.f32 %v114
    %v116 = vadd.f32 %v109, %v115
    %117 = vset.pattern.permute.xlu0 6
    %118 = vperm.xlu0 %117, %v74
    %v119 = vpop.permute.xlu0 %118
    %vm120 = vcmp.eq.s32.totalorder %v56, %v119
    %v121 = vsel %vm120, 1, 0
    %v122 = vcvt.s32.f32 %v121
    %v123 = vadd.f32 %v116, %v122
    %124 = vset.pattern.permute.xlu0 7
    %125 = vperm.xlu0 %124, %v74
    %v126 = vpop.permute.xlu0 %125
    %vm127 = vcmp.eq.s32.totalorder %v56, %v126
    %v128 = vsel %vm127, 1, 0
    %v129 = vcvt.s32.f32 %v128
    %v130 = vadd.f32 %v123, %v129
    %vm131 = vcmp.eq.s32.totalorder %v56, 112
    %v132 = vld [vmem:[%s3] sm:$0xff]
    %134 = vset.pattern.permute.xlu0 0
    %135 = vperm.xlu0 %134, %v132
    %v136 = vpop.permute.xlu0 %135
    %v138 = vsel %vm131, %v136, 0.0
    %v139 = vadd.f32 %v130, %v138
    %v140 = vld [vmem:[#allocation2] sm:$0xff]
    %v141 = vld [vmem:[#allocation2 + $0x8] sm:$0xff]
    %v142 = vld [vmem:[#allocation2 + $0x10] sm:$0xff]
    %v143 = vld [vmem:[#allocation2 + $0x18] sm:$0xff]
    %v144 = vld [vmem:[#allocation2 + $0x20] sm:$0xff]
    %v145 = vld [vmem:[#allocation2 + $0x28] sm:$0xff]
    %v146 = vld [vmem:[#allocation2 + $0x30] sm:$0xff]
    %v147 = vld [vmem:[#allocation2 + $0x38] sm:$0xff]
    %v148 = vld [vmem:[#allocation2 + $0x40] sm:$0xff]
    %v149 = vld [vmem:[#allocation2 + $0x48] sm:$0xff]
    %v150 = vld [vmem:[#allocation2 + $0x50] sm:$0xff]
    %v151 = vld [vmem:[#allocation2 + $0x58] sm:$0xff]
    %v152 = vld [vmem:[#allocation2 + $0x60] sm:$0xff]
    %v153 = vld [vmem:[#allocation2 + $0x68] sm:$0xff]
    %v154 = vld [vmem:[#allocation2 + $0x70] sm:$0xff]
    %v155 = vld [vmem:[#allocation2 + $0x78] sm:$0xff]
    %156 = vmatprep.subr.mxu0 0.0
    %157 = vmatpush1.msra.mxu0 %v155
    %158 = vmatprep.subr.mxu0 0.0
    %159 = vmatpush1.msra.mxu0 %v154
    %160 = vmatprep.subr.mxu0 0.0
    %161 = vmatpush1.msra.mxu0 %v153
    %162 = vmatprep.subr.mxu0 0.0
    %163 = vmatpush1.msra.mxu0 %v152
    %164 = vmatprep.subr.mxu0 0.0
    %165 = vmatpush1.msra.mxu0 %v151
    %166 = vmatprep.subr.mxu0 0.0
    %167 = vmatpush1.msra.mxu0 %v150
    %168 = vmatprep.subr.mxu0 0.0
    %169 = vmatpush1.msra.mxu0 %v149
    %170 = vmatprep.subr.mxu0 0.0
    %171 = vmatpush1.msra.mxu0 %v148
    %172 = vmatprep.subr.mxu0 0.0
    %173 = vmatpush1.msra.mxu0 %v147
    %174 = vmatprep.subr.mxu0 0.0
    %175 = vmatpush1.msra.mxu0 %v146
    %176 = vmatprep.subr.mxu0 0.0
    %177 = vmatpush1.msra.mxu0 %v145
    %178 = vmatprep.subr.mxu0 0.0
    %179 = vmatpush1.msra.mxu0 %v144
    %180 = vmatprep.subr.mxu0 0.0
    %181 = vmatpush1.msra.mxu0 %v143
    %182 = vmatprep.subr.mxu0 0.0
    %183 = vmatpush1.msra.mxu0 %v142
    %184 = vmatprep.subr.mxu0 0.0
    %185 = vmatpush1.msra.mxu0 %v141
    %186 = vmatprep.subr.mxu0 0.0
    %187 = vmatpush1.msra.mxu0 %v140
    %188 = vmatprep.subr.mxu0 0.0
    %189 = vmatpush2.msra.mxu0 0.0
    %190 = vmatprep.subr.mxu0 0.0
    %191 = vmatpush2.msra.mxu0 0.0
    %192 = vmatprep.subr.mxu0 0.0
    %193 = vmatpush2.msra.mxu0 0.0
    %194 = vmatprep.subr.mxu0 0.0
    %195 = vmatpush2.msra.mxu0 0.0
    %196 = vmatprep.subr.mxu0 0.0
    %197 = vmatpush2.msra.mxu0 0.0
    %198 = vmatprep.subr.mxu0 0.0
    %199 = vmatpush2.msra.mxu0 0.0
    %200 = vmatprep.subr.mxu0 0.0
    %201 = vmatpush2.msra.mxu0 0.0
    %202 = vmatprep.subr.mxu0 0.0
    %203 = vmatpush2.msra.mxu0 0.0
    %204 = vmatprep.subr.mxu0 0.0
    %205 = vmatpush2.msra.mxu0 0.0
    %206 = vmatprep.subr.mxu0 0.0
    %207 = vmatpush2.msra.mxu0 0.0
    %208 = vmatprep.subr.mxu0 0.0
    %209 = vmatpush2.msra.mxu0 0.0
    %210 = vmatprep.subr.mxu0 0.0
    %211 = vmatpush2.msra.mxu0 0.0
    %212 = vmatprep.subr.mxu0 0.0
    %213 = vmatpush2.msra.mxu0 0.0
    %214 = vmatprep.subr.mxu0 0.0
    %215 = vmatpush2.msra.mxu0 0.0
    %216 = vmatprep.subr.mxu0 0.0
    %217 = vmatpush2.msra.mxu0 0.0
    %218 = vmatprep.subr.mxu0 0.0
    %219 = vmatpush2.msra.mxu0 0.0
    %220 = vmatprep.mubr.f32.mxu0 0.0
    %221 = vmatmul.mubr.f32.gmra.mxu0 %v139
    %v222 = vpop.f32.mrf.mxu0
    %v223 = vadd.f32 0.0, %v222
    %v224 = vpop.f32.mrf.mxu0
    %225 = vdwg.mxu0
    %v226 = vld [vmem:[#allocation5] sm:$0xff]
    %v227 = vld [vmem:[#allocation5 + $0x8] sm:$0xff]
    %v228 = vld [vmem:[#allocation5 + $0x10] sm:$0xff]
    %v229 = vld [vmem:[#allocation5 + $0x18] sm:$0xff]
    %v230 = vld [vmem:[#allocation5 + $0x20] sm:$0xff]
    %v231 = vld [vmem:[#allocation5 + $0x28] sm:$0xff]
    %v232 = vld [vmem:[#allocation5 + $0x30] sm:$0xff]
    %v233 = vld [vmem:[#allocation5 + $0x38] sm:$0xff]
    %v234 = vld [vmem:[#allocation5 + $0x40] sm:$0xff]
    %v235 = vld [vmem:[#allocation5 + $0x48] sm:$0xff]
    %v236 = vld [vmem:[#allocation5 + $0x50] sm:$0xff]
    %v237 = vld [vmem:[#allocation5 + $0x58] sm:$0xff]
    %v238 = vld [vmem:[#allocation5 + $0x60] sm:$0xff]
    %v239 = vld [vmem:[#allocation5 + $0x68] sm:$0xff]
    %v240 = vld [vmem:[#allocation5 + $0x70] sm:$0xff]
    %v241 = vld [vmem:[#allocation5 + $0x78] sm:$0xff]
    %v242 = vld [vmem:[%s6] sm:$0x1]
    %v244 = vlaneseq
    %v245 = vshrl.u32 %v244, 7
    %v246 = vsub.s32 0, %v245
    %v247 = vrot.slane %v242, %v246
    %249 = vmatprep.subr.mxu0 0.0
    %250 = vmatpush1.msra.mxu0 %v241
    %251 = vmatprep.subr.mxu0 0.0
    %252 = vmatpush1.msra.mxu0 %v240
    %253 = vmatprep.subr.mxu0 0.0
    %254 = vmatpush1.msra.mxu0 %v239
    %255 = vmatprep.subr.mxu0 0.0
    %256 = vmatpush1.msra.mxu0 %v238
    %257 = vmatprep.subr.mxu0 0.0
    %258 = vmatpush1.msra.mxu0 %v237
    %259 = vmatprep.subr.mxu0 0.0
    %260 = vmatpush1.msra.mxu0 %v236
    %261 = vmatprep.subr.mxu0 0.0
    %262 = vmatpush1.msra.mxu0 %v235
    %263 = vmatprep.subr.mxu0 0.0
    %264 = vmatpush1.msra.mxu0 %v234
    %265 = vmatprep.subr.mxu0 0.0
    %266 = vmatpush1.msra.mxu0 %v233
    %267 = vmatprep.subr.mxu0 0.0
    %268 = vmatpush1.msra.mxu0 %v232
    %269 = vmatprep.subr.mxu0 0.0
    %270 = vmatpush1.msra.mxu0 %v231
    %271 = vmatprep.subr.mxu0 0.0
    %272 = vmatpush1.msra.mxu0 %v230
    %273 = vmatprep.subr.mxu0 0.0
    %274 = vmatpush1.msra.mxu0 %v229
    %275 = vmatprep.subr.mxu0 0.0
    %276 = vmatpush1.msra.mxu0 %v228
    %277 = vmatprep.subr.mxu0 0.0
    %278 = vmatpush1.msra.mxu0 %v227
    %279 = vmatprep.subr.mxu0 0.0
    %280 = vmatpush1.msra.mxu0 %v226
    %281 = vmatprep.subr.mxu0 0.0
    %282 = vmatpush2.msra.mxu0 0.0
    %283 = vmatprep.subr.mxu0 0.0
    %284 = vmatpush2.msra.mxu0 0.0
    %285 = vmatprep.subr.mxu0 0.0
    %286 = vmatpush2.msra.mxu0 0.0
    %287 = vmatprep.subr.mxu0 0.0
    %288 = vmatpush2.msra.mxu0 0.0
    %289 = vmatprep.subr.mxu0 0.0
    %290 = vmatpush2.msra.mxu0 0.0
    %291 = vmatprep.subr.mxu0 0.0
    %292 = vmatpush2.msra.mxu0 0.0
    %293 = vmatprep.subr.mxu0 0.0
    %294 = vmatpush2.msra.mxu0 0.0
    %295 = vmatprep.subr.mxu0 0.0
    %296 = vmatpush2.msra.mxu0 0.0
    %297 = vmatprep.subr.mxu0 0.0
    %298 = vmatpush2.msra.mxu0 0.0
    %299 = vmatprep.subr.mxu0 0.0
    %300 = vmatpush2.msra.mxu0 0.0
    %301 = vmatprep.subr.mxu0 0.0
    %302 = vmatpush2.msra.mxu0 0.0
    %303 = vmatprep.subr.mxu0 0.0
    %304 = vmatpush2.msra.mxu0 0.0
    %305 = vmatprep.subr.mxu0 0.0
    %306 = vmatpush2.msra.mxu0 0.0
    %307 = vmatprep.subr.mxu0 0.0
    %308 = vmatpush2.msra.mxu0 0.0
    %309 = vmatprep.subr.mxu0 0.0
    %310 = vmatpush2.msra.mxu0 0.0
    %311 = vmatprep.subr.mxu0 0.0
    %312 = vmatpush2.msra.mxu0 0.0
    %313 = vmatprep.mubr.f32.mxu0 0.0
    %314 = vmatmul.mubr.f32.gmra.mxu0 %v223
    %v315 = vpop.f32.mrf.mxu0
    %v316 = vadd.f32 %v247, %v315
    %v317 = vpop.f32.mrf.mxu0
    %318 = vdwg.mxu0
    %319 = vst [vmem:[#allocation7] sm:$0xff] %v316
    // Predicated region
    $region38: #{tpu_custom_call.1} parent=1 // pred_check
      _
    $region39: #{tpu_custom_call.1} parent=1 // pred_check_branch
      %321 = sbr.rel (0) target = $region41
    $region40: #{tpu_custom_call.1} parent=1 // pred_region
      %s323 = ssub.s32 128, 128
      %324 = vsyncadd [#allocation4], %s323
      %s326 = sshll.u32 [#allocation7], 4
      %s327 = int_to_ptr.vmem [resolvable:$true] %s326
      %329 = dma.vmem_to_hbm [thread:$0]  %s327, 128, %s7, [#allocation4]
    $region41: #{tpu_custom_call.1} parent=1 // pred_fallthru
      _
    // Predicated region
    $region42: #{tpu_custom_call.1} parent=1 // pred_check
      _
    $region43: #{tpu_custom_call.1} parent=1 // pred_check_branch
      %331 = sbr.rel (0) target = $region45
    $region44: #{tpu_custom_call.1} parent=1 // pred_region
      %332 = dma.done [#allocation4], 128
    $region45: #{tpu_custom_call.1} parent=1 // pred_fallthru
      _
    %333 = vsyncpa [#allocation3], 1
    %334 = vsyncpa [#allocation6], 1
    %335 = vsyncpa [#allocation4], 1

</llo_original>
